<compile_context>
chip_gen: v5e
topology: v5e:2x2
jax: 0.10.0
libtpu: 0.0.40
codegen_flags: <defaults>
</compile_context>

<pallas_src>
import jax
import jax.numpy as jnp
from jax.experimental import pallas as pl
from jax.experimental.pallas import tpu as pltpu

_MIB = 1024 * 1024
_MIN_SPLIT_BYTES = 512 * 1024  # only force extra grid steps if each still moves >= this
_LANES = 128


def _round_up(v, m):
    return -(-v // m) * m


def _round_down(v, m):
    return (v // m) * m


def _random_relu_kernel(x_ref, w_ref, o_ref):
    # Elementwise hot path on the VPU: relu + multiply, dtype preserved.
    x = x_ref[...]
    o_ref[...] = w_ref[...] * jnp.maximum(x, jnp.zeros_like(x))


def _tpu_tuning():
    """(target_block_bytes, vmem_limit_bytes) chosen per TPU generation."""
    try:
        vmem_cap = int(pltpu.get_tpu_info().vmem_capacity_bytes)
    except Exception:
        vmem_cap = 0
    if vmem_cap >= 100 * _MIB:   # v5e / v6e: 128 MiB physical VMEM
        return 8 * _MIB, 96 * _MIB
    if vmem_cap > 0:             # v7x: 64 MiB per TensorCore
        return 6 * _MIB, 48 * _MIB
    return 4 * _MIB, 48 * _MIB   # unknown backend: conservative defaults


def random_relu(x, w, *, target_block_bytes=None, vmem_limit_bytes=None):
    assert x.shape == w.shape, "input and weight must have the same shape"
    assert x.dtype == w.dtype, "input and weight must have the same dtype"
    orig_shape = x.shape
    n = x.size
    if n == 0:
        return jnp.zeros(orig_shape, x.dtype)

    auto_block, auto_vmem = _tpu_tuning()
    if target_block_bytes is None:
        target_block_bytes = auto_block
    if vmem_limit_bytes is None:
        vmem_limit_bytes = auto_vmem

    itemsize = jnp.dtype(x.dtype).itemsize
    pack = max(8, 32 // itemsize)   # sublane pack: 8 f32 / 16 bf16 / 32 int8

    cost = pl.CostEstimate(flops=2 * n, transcendentals=0,
                           bytes_accessed=3 * n * itemsize)
    cparams = pltpu.CompilerParams(
        dimension_semantics=("parallel",),
        vmem_limit_bytes=vmem_limit_bytes,
    )

    xf = x.reshape(-1)
    wf = w.reshape(-1)

    if n % _LANES == 0:
        # ---------- aligned fast path: lane-dense 2-D slab, metadata-only reshape ----------
        width = _LANES
        for cand in (8192, 4096, 2048, 1024, 512, 256):
            if n % cand == 0:
                width = cand
                break
        rows = n // width
        bytes_per_row = width * itemsize

        tile_rows = max(pack, _round_down(target_block_bytes // bytes_per_row, pack))
        # Force >= 4 grid steps when each step still moves a decent chunk:
        # pipeline overlap on all chips, megacore sharding on v7x.
        if rows >= 4 * pack and rows * bytes_per_row >= 4 * _MIN_SPLIT_BYTES:
            cap = max(pack, _round_up(-(-rows // 4), pack))
            tile_rows = min(tile_rows, cap)
        if tile_rows >= rows:
            tile_rows = rows          # full extent -> always a legal block shape
            grid = 1
        else:
            grid = pl.cdiv(rows, tile_rows)   # partial last block is masked

        x2 = xf.reshape(rows, width)
        w2 = wf.reshape(rows, width)
        out2 = pl.pallas_call(
            _random_relu_kernel,
            out_shape=jax.ShapeDtypeStruct((rows, width), x.dtype),
            grid_spec=pltpu.PrefetchScalarGridSpec(
                num_scalar_prefetch=0,
                grid=(grid,),
                in_specs=[pl.BlockSpec((tile_rows, width), lambda i: (i, 0)),
                          pl.BlockSpec((tile_rows, width), lambda i: (i, 0))],
                out_specs=pl.BlockSpec((tile_rows, width), lambda i: (i, 0)),
            ),
            compiler_params=cparams,
            cost_estimate=cost,
        )(x2, w2)
        return out2.reshape(orig_shape)

    # ---------- ragged path: unpadded 1-D view, no jnp.pad / no output slice ----------
    base = pack * _LANES                 # one (pack, 128) tile worth of elements
    block = max(base, _round_down(target_block_bytes // itemsize, base))
    if n >= 4 * base and n * itemsize >= 4 * _MIN_SPLIT_BYTES:
        cap = max(base, _round_up(-(-n // 4), base))
        block = min(block, cap)
    if block >= n:
        block = n                        # single full-extent block (always legal)
        grid = 1
    else:
        grid = pl.cdiv(n, block)         # partial last block is masked

    outf = pl.pallas_call(
        _random_relu_kernel,
        out_shape=jax.ShapeDtypeStruct((n,), x.dtype),
        grid_spec=pltpu.PrefetchScalarGridSpec(
            num_scalar_prefetch=0,
            grid=(grid,),
            in_specs=[pl.BlockSpec((block,), lambda i: (i,)),
                      pl.BlockSpec((block,), lambda i: (i,))],
            out_specs=pl.BlockSpec((block,), lambda i: (i,)),
        ),
        compiler_params=cparams,
        cost_estimate=cost,
    )(xf, wf)
    return outf.reshape(orig_shape)


if __name__ == "__main__":
    key = jax.random.PRNGKey(0)
    kx, kw = jax.random.split(key)

    # 1) aligned fast path: NCHW activations, batch=2 channels=4 spatial=16
    x = jax.random.normal(kx, (2, 4, 16, 16), dtype=jnp.float32)
    w = jax.random.normal(kw, (2, 4, 16, 16), dtype=jnp.float32)
    out = random_relu(x, w)
    jax.block_until_ready(out)
    ref = w * jnp.maximum(x, 0.0)
    assert jnp.allclose(out, ref, atol=1e-6), "aligned f32 mismatch"

    # 2) aligned path, bf16 (dtype preserved end-to-end)
    xb = x.astype(jnp.bfloat16)
    wb = w.astype(jnp.bfloat16)
    outb = random_relu(xb, wb)
    jax.block_until_ready(outb)
    refb = (wb * jnp.maximum(xb, 0)).astype(jnp.float32)
    assert jnp.allclose(outb.astype(jnp.float32), refb, atol=1e-2, rtol=1e-2), "bf16 mismatch"

    # 3) ragged size (numel % 128 != 0): single full-extent 1-D block, no padding
    k1, k2 = jax.random.split(kw)
    x3 = jax.random.normal(k1, (3, 5, 7), dtype=jnp.float32)
    w3 = jax.random.normal(k2, (3, 5, 7), dtype=jnp.float32)
    out3 = random_relu(x3, w3)
    jax.block_until_ready(out3)
    ref3 = w3 * jnp.maximum(x3, 0.0)
    assert jnp.allclose(out3, ref3, atol=1e-6), "ragged small mismatch"

    # 4) ragged size, multi-block with masked partial last block (tiny block forced)
    k3, k4 = jax.random.split(k1)
    x4 = jax.random.normal(k3, (5, 501), dtype=jnp.float32)   # 2505 elems, % 128 != 0
    w4 = jax.random.normal(k4, (5, 501), dtype=jnp.float32)
    out4 = random_relu(x4, w4, target_block_bytes=4096)
    jax.block_until_ready(out4)
    ref4 = w4 * jnp.maximum(x4, 0.0)
    assert jnp.allclose(out4, ref4, atol=1e-6), "ragged multi-block mismatch"

    print("KERNEL_OK")
</pallas_src>

<mosaic_0001>
module attributes {stable_mosaic.version = 11 : i64} {
  func.func @_random_relu_kernel(%arg0: i32, %arg1: memref<1x2048xf32, #tpu.memory_space<vmem>>, %arg2: memref<1x2048xf32, #tpu.memory_space<vmem>>, %arg3: memref<1x2048xf32, #tpu.memory_space<vmem>>) attributes {dimension_semantics = [#tpu.dimension_semantics<parallel>], iteration_bounds = array<i64: 1>, scalar_prefetch = 0 : i64, scratch_operands = 0 : i64, tpu.core_type = #tpu.core_type<tc>, window_params = [{transform_indices = @transform_0, window_bounds = array<i64: 1, 2048>}, {transform_indices = @transform_1, window_bounds = array<i64: 1, 2048>}, {transform_indices = @transform_2, window_bounds = array<i64: 1, 2048>}]} {
    %c0 = arith.constant 0 : index
    %c0_0 = arith.constant 0 : index
    %0 = vector.load %arg1[%c0, %c0_0] : memref<1x2048xf32, #tpu.memory_space<vmem>>, vector<1x2048xf32>
    %c0_1 = arith.constant 0 : index
    %c0_2 = arith.constant 0 : index
    %1 = vector.load %arg2[%c0_1, %c0_2] : memref<1x2048xf32, #tpu.memory_space<vmem>>, vector<1x2048xf32>
    %cst = arith.constant 0.000000e+00 : f32
    %2 = vector.broadcast %cst : f32 to vector<1x2048xf32>
    %3 = arith.maximumf %0, %2 : vector<1x2048xf32>
    %4 = arith.mulf %1, %3 : vector<1x2048xf32>
    %c0_3 = arith.constant 0 : index
    %c0_4 = arith.constant 0 : index
    %5 = vector.load %arg3[%c0_3, %c0_4] : memref<1x2048xf32, #tpu.memory_space<vmem>>, vector<1x2048xf32>
    tpu.vector_store %arg3[%c0_3, %c0_4], %4 {strides = array<i32>} : memref<1x2048xf32, #tpu.memory_space<vmem>>, vector<1x2048xf32>,
    return
  }
  func.func @transform_0(%arg0: i32) -> (i32, i32) {
    %c0_i32 = arith.constant 0 : i32
    %c0_i32_0 = arith.constant 0 : i32
    return %arg0, %c0_i32 : i32, i32
  }
  func.func @transform_1(%arg0: i32) -> (i32, i32) {
    %c0_i32 = arith.constant 0 : i32
    %c0_i32_0 = arith.constant 0 : i32
    return %arg0, %c0_i32 : i32, i32
  }
  func.func @transform_2(%arg0: i32) -> (i32, i32) {
    %c0_i32 = arith.constant 0 : i32
    %c0_i32_0 = arith.constant 0 : i32
    return %arg0, %c0_i32 : i32, i32
  }
}

</mosaic_0001>

<llo_original>
// kernel: tpu_custom_call.1
$region0: #{tpu_custom_call.1}
  #allocation0 [shape = 'u32[]', space=smem, size = 0x4, offset = 0x4, fixed_abs, tag = 'smem constant byte address 0x4 - core index']
  #allocation1 [shape = 'u32[72,128]{1,0:T(1,128)}', space=vmem, size = 0x9000, scoped, tag = 'internal scratch']
  %s0 = inlined_call_operand.hbm [shape: f32[1,2048], index: 0, kind: input, shape index: {}]
  %s1 = inlined_call_operand.hbm [shape: f32[1,2048], index: 1, kind: input, shape index: {}]
  %s2 = inlined_call_operand.hbm [shape: f32[1,2048], index: 2, kind: output, shape index: {}]
  %s3 = sld [smem:[#allocation0]]
  $region26: #{tpu_custom_call.1} parent=0
    _
  %s5 = ssub.s32 1, %s3
  %s6 = scalar_select 0, %s5, %s3
  $region1: #{tpu_custom_call.1} parent=0
    #allocation2 [shape = 'u8[8192]{0}', space=vmem, size = 0x2000, scoped, tag = 'input window, operand 0, single buffered']
    #allocation3 [shape = 's32[1]{0}', space=sflag, size = 0x4, scoped, tag = 'scoped memory for tpu_custom_call.1']
    #allocation4 [shape = 's32[1]{0}', space=sflag, size = 0x4, scoped, tag = 'scoped memory for tpu_custom_call.1']
    #allocation5 [shape = 'u8[8192]{0}', space=vmem, size = 0x2000, scoped, tag = 'input window, operand 1, single buffered']
    #allocation6 [shape = 's32[1]{0}', space=sflag, size = 0x4, scoped, tag = 'scoped memory for tpu_custom_call.1']
    #allocation7 [shape = 'u8[8192]{0}', space=vmem, size = 0x2000, scoped, tag = 'output window, operand 0, single buffered']
    %7 = vsyncpa [#allocation3], 0
    %8 = vsyncpa [#allocation6], 0
    %9 = vsyncpa [#allocation4], 0
    // Predicated region
    $region2: #{tpu_custom_call.1} parent=1 // pred_check
      _
    $region3: #{tpu_custom_call.1} parent=1 // pred_check_branch
      %11 = sbr.rel (0) target = $region5
    $region4: #{tpu_custom_call.1} parent=1 // pred_region
      %13 = vsyncadd [#allocation3], 0
      %s15 = sshll.u32 %s0, 4
      %s16 = int_to_ptr.hbm [resolvable:$true] %s15
      %s17 = sshll.u32 [#allocation2], 4
      %s18 = int_to_ptr.vmem [resolvable:$true] %s17
      %20 = dma.hbm_to_vmem [thread:$0]  %s16, 256, %s18, [#allocation3]
    $region5: #{tpu_custom_call.1} parent=1 // pred_fallthru
      _
    // Predicated region
    $region6: #{tpu_custom_call.1} parent=1 // pred_check
      _
    $region7: #{tpu_custom_call.1} parent=1 // pred_check_branch
      %22 = sbr.rel (0) target = $region9
    $region8: #{tpu_custom_call.1} parent=1 // pred_region
      %24 = vsyncadd [#allocation6], 0
      %s26 = sshll.u32 %s1, 4
      %s27 = int_to_ptr.hbm [resolvable:$true] %s26
      %s28 = sshll.u32 [#allocation5], 4
      %s29 = int_to_ptr.vmem [resolvable:$true] %s28
      %31 = dma.hbm_to_vmem [thread:$0]  %s27, 256, %s29, [#allocation6]
    $region9: #{tpu_custom_call.1} parent=1 // pred_fallthru
      _
    // Predicated region
    $region10: #{tpu_custom_call.1} parent=1 // pred_check
      _
    $region11: #{tpu_custom_call.1} parent=1 // pred_check_branch
      %33 = sbr.rel (0) target = $region13
    $region12: #{tpu_custom_call.1} parent=1 // pred_region
      %35 = dma.done [#allocation3], 256
    $region13: #{tpu_custom_call.1} parent=1 // pred_fallthru
      _
    // Predicated region
    $region14: #{tpu_custom_call.1} parent=1 // pred_check
      _
    $region15: #{tpu_custom_call.1} parent=1 // pred_check_branch
      %37 = sbr.rel (0) target = $region17
    $region16: #{tpu_custom_call.1} parent=1 // pred_region
      %39 = dma.done [#allocation6], 256
    $region17: #{tpu_custom_call.1} parent=1 // pred_fallthru
      _
    %v40 = vld [vmem:[#allocation2] sm:$0xff]
    %v41 = vld [vmem:[#allocation2 + $0x8] sm:$0xff]
    %v42 = vld [vmem:[#allocation5] sm:$0xff]
    %v43 = vld [vmem:[#allocation5 + $0x8] sm:$0xff]
    %v44 = vmax.f32 %v40, 0.0
    %v45 = vmax.f32 %v41, 0.0
    %v46 = vmul.f32 %v42, %v44
    %v47 = vmul.f32 %v43, %v45
    %48 = vst [vmem:[#allocation7] sm:$0xff] %v46
    %49 = vst [vmem:[#allocation7 + $0x8] sm:$0xff] %v47
    // Predicated region
    $region18: #{tpu_custom_call.1} parent=1 // pred_check
      _
    $region19: #{tpu_custom_call.1} parent=1 // pred_check_branch
      %51 = sbr.rel (0) target = $region21
    $region20: #{tpu_custom_call.1} parent=1 // pred_region
      %53 = vsyncadd [#allocation4], 0
      %s55 = sshll.u32 [#allocation7], 4
      %s56 = int_to_ptr.vmem [resolvable:$true] %s55
      %s57 = sshll.u32 %s2, 4
      %s58 = int_to_ptr.hbm [resolvable:$true] %s57
      %60 = dma.vmem_to_hbm [thread:$0]  %s56, 256, %s58, [#allocation4]
    $region21: #{tpu_custom_call.1} parent=1 // pred_fallthru
      _
    // Predicated region
    $region22: #{tpu_custom_call.1} parent=1 // pred_check
      _
    $region23: #{tpu_custom_call.1} parent=1 // pred_check_branch
      %62 = sbr.rel (0) target = $region25
    $region24: #{tpu_custom_call.1} parent=1 // pred_region
      %64 = dma.done [#allocation4], 256
    $region25: #{tpu_custom_call.1} parent=1 // pred_fallthru
      _
    %65 = vsyncpa [#allocation3], 1
    %66 = vsyncpa [#allocation6], 1
    %67 = vsyncpa [#allocation4], 1

</llo_original>
